<compile_context>
chip_gen: v7x
topology: tpu7x:2x2x1
jax: 0.10.0
libtpu: 0.0.40
codegen_flags: <defaults>
</compile_context>

<pallas_src>
import jax
import jax.numpy as jnp
from jax import lax
from jax.experimental import pallas as pl
from jax.experimental.pallas import tpu as pltpu


def _round_up(x, m):
    return ((x + m - 1) // m) * m


def _pool_project_kernel(indptr_ref, x_ref, w_ref, out_ref,
                         acc_ref, starts_ref, ends_ref):
    """Per-core partial segment-sum of raw points + one projection at the end.

    Grid: (num_splits ["parallel"], tiles_per_split ["arbitrary"]).
      indptr_ref : SMEM (B+1,) int32 CSR boundaries (scalar prefetch)
      x_ref      : VMEM (tile_n, Din) f32 streamed point features
      w_ref      : VMEM (Din, C)  f32 resident projection weight
      out_ref    : VMEM (1, B, C) f32 per-split projected partial segment sums
      acc_ref    : VMEM (B, Din)  f32 per-core segment-sum accumulator
      starts_ref / ends_ref : VMEM (B, 1) int32 hoisted segment bounds
    """
    c = pl.program_id(0)
    i = pl.program_id(1)
    tiles_per_split = pl.num_programs(1)
    tile_n = x_ref.shape[0]
    num_segments = acc_ref.shape[0]

    @pl.when(i == 0)
    def _init():
        acc_ref[...] = jnp.zeros_like(acc_ref)
        # Grid-invariant segment bounds: built once, reused every tile.
        seg = lax.broadcasted_iota(jnp.int32, (num_segments, 1), 0)
        starts = jnp.zeros((num_segments, 1), jnp.int32)
        ends = jnp.zeros((num_segments, 1), jnp.int32)
        for b in range(num_segments):            # B is small & static
            starts = jnp.where(seg == b, indptr_ref[b], starts)
            ends = jnp.where(seg == b, indptr_ref[b + 1], ends)
        starts_ref[...] = starts
        ends_ref[...] = ends

    # One-hot membership P[b, n] from GLOBAL row indices of this tile.
    # Row-padding (global index >= indptr[B]) falls outside every segment.
    row0 = (c * tiles_per_split + i) * tile_n
    gcol = row0 + lax.broadcasted_iota(jnp.int32, (num_segments, tile_n), 1)
    p = ((gcol >= starts_ref[...]) & (gcol < ends_ref[...])).astype(jnp.float32)

    # Pool-first: per-segment sums of RAW features on the MXU, [B,tile_n]@[tile_n,Din].
    acc_ref[...] += jnp.dot(p, x_ref[...], preferred_element_type=jnp.float32)

    @pl.when(i == tiles_per_split - 1)
    def _finalize():
        # Single tiny projection of the partial pooled sums; 1/count normalization
        # and the (masked) bias are applied after the cross-core combine in the
        # wrapper, since they must happen once over the combined sum.
        out_ref[0] = jnp.dot(acc_ref[...], w_ref[...],
                             preferred_element_type=jnp.float32)


def default_classifier_forward(x, weight, bias, offset, category=None,
                               *, tile_n=2048, num_splits=2):
    """x: [N, Din] point feats; offset: [B] Pointcept cumulative end indices."""
    n, din = x.shape
    din_w, num_classes = weight.shape
    assert din_w == din, "weight rows must match feature dim"
    assert bias.shape == (1, num_classes), "bias must be [1, num_classes]"
    num_segments = offset.shape[0]

    x = x.astype(jnp.float32)
    weight = weight.astype(jnp.float32)
    bias = bias.astype(jnp.float32)

    # nn.functional.pad(point.offset, (1, 0)) -> CSR indptr of length B+1 (SMEM).
    indptr = jnp.pad(offset.astype(jnp.int32), (1, 0))

    # Only a cheap ROW pad (no Din padding, no bf16 pre-pass):
    # N -> multiple of tile_n * num_splits so the parallel axis splits evenly.
    tile_n = max(8, min(tile_n, _round_up(pl.cdiv(n, num_splits), 8)))
    n_p = _round_up(n, tile_n * num_splits)
    x_p = x if n_p == n else jnp.zeros((n_p, din), x.dtype).at[:n].set(x)
    tiles_per_split = n_p // tile_n // num_splits

    partial = pl.pallas_call(
        _pool_project_kernel,
        out_shape=jax.ShapeDtypeStruct(
            (num_splits, num_segments, num_classes), jnp.float32),
        grid_spec=pltpu.PrefetchScalarGridSpec(
            num_scalar_prefetch=1,                                   # indptr -> SMEM
            grid=(num_splits, tiles_per_split),
            in_specs=[
                # x streams with its TRUE last dim (block last dim == array extent).
                pl.BlockSpec((tile_n, din),
                             lambda c, i, ip: (c * tiles_per_split + i, 0)),
                pl.BlockSpec((din, num_classes), lambda c, i, ip: (0, 0)),  # resident W
            ],
            out_specs=pl.BlockSpec((1, num_segments, num_classes),
                                   lambda c, i, ip: (c, 0, 0)),
            scratch_shapes=[
                pltpu.VMEM((num_segments, din), jnp.float32),   # per-core acc
                pltpu.VMEM((num_segments, 1), jnp.int32),       # segment starts
                pltpu.VMEM((num_segments, 1), jnp.int32),       # segment ends
            ],
        ),
        compiler_params=pltpu.CompilerParams(
            # axis 0 shards across TensorCores on v7x; axis 1 is the N reduction
            dimension_semantics=("parallel", "arbitrary"),
            vmem_limit_bytes=32 * 1024 * 1024,   # footprint ~1-2 MiB, well under limit
        ),
    )(indptr, x_p, weight)

    # Cross-core combine + segment_csr 'mean' normalization + backbone bias.
    # Empty segments: pooled feature is 0 and the bias is masked off, matching
    # "bias applied per point inside the backbone, then mean over zero points".
    seg_sum = jnp.sum(partial, axis=0)                               # [B, C]
    counts = (indptr[1:] - indptr[:-1]).astype(jnp.float32)          # [B]
    nonempty = (counts > 0).astype(jnp.float32)[:, None]             # [B, 1]
    cls_logits = seg_sum / jnp.maximum(counts, 1.0)[:, None] + bias * nonempty

    if category is None:
        return {"cls_logits": cls_logits}

    # criteria: Pointcept default CrossEntropyLoss -- plain-JAX glue.
    logp = jax.nn.log_softmax(cls_logits, axis=-1)
    loss = -jnp.mean(jnp.take_along_axis(logp, category[:, None], axis=-1))
    return {"loss": loss, "cls_logits": cls_logits}


if __name__ == "__main__":
    key = jax.random.PRNGKey(0)
    k1, k2, k3, k4 = jax.random.split(key, 4)

    B = 2                # batch size (number of point clouds)
    N = 300              # total number of points across the batch
    DIN = 32             # raw point feature dim fed to the synthetic backbone
    NUM_CLASSES = 40     # module default num_classes

    x = jax.random.normal(k1, (N, DIN), dtype=jnp.float32)
    weight = jax.random.normal(k2, (DIN, NUM_CLASSES), dtype=jnp.float32) * 0.05
    bias = jax.random.normal(k3, (1, NUM_CLASSES), dtype=jnp.float32) * 0.01
    offset = jnp.array([137, N], dtype=jnp.int32)   # Pointcept cumulative offsets
    category = jax.random.randint(k4, (B,), 0, NUM_CLASSES)

    # Small tile_n so the test exercises multi-step accumulation AND the 2-way split
    # (segment 1 straddles the split boundary and is combined in the wrapper).
    out = default_classifier_forward(x, weight, bias, offset, category, tile_n=64)
    jax.block_until_ready(out["cls_logits"])
    jax.block_until_ready(out["loss"])

    # plain-JAX f32 reference: per-point projection + bias, then segment mean.
    feat_ref = jnp.dot(x, weight, precision=lax.Precision.HIGHEST) + bias
    pooled_ref = jnp.stack([feat_ref[0:137].mean(axis=0),
                            feat_ref[137:N].mean(axis=0)])
    assert jnp.allclose(out["cls_logits"], pooled_ref, atol=2e-3, rtol=2e-3), "mismatch"

    print("KERNEL_OK")
</pallas_src>

<mosaic_0001>
module attributes {stable_mosaic.version = 11 : i64} {
  func.func @_pool_project_kernel(%arg0: i32, %arg1: i32, %arg2: memref<3xi32, #tpu.memory_space<smem>>, %arg3: memref<64x32xf32, #tpu.memory_space<vmem>>, %arg4: memref<32x40xf32, #tpu.memory_space<vmem>>, %arg5: memref<1x2x40xf32, #tpu.memory_space<vmem>>, %arg6: memref<2x32xf32, #tpu.memory_space<vmem>>, %arg7: memref<2x1xi32, #tpu.memory_space<vmem>>, %arg8: memref<2x1xi32, #tpu.memory_space<vmem>>) attributes {dimension_semantics = [#tpu.dimension_semantics<parallel>, #tpu.dimension_semantics<arbitrary>], iteration_bounds = array<i64: 2, 3>, scalar_prefetch = 1 : i64, scratch_operands = 3 : i64, tpu.core_type = #tpu.core_type<tc>, window_params = [{transform_indices = @transform_0, window_bounds = array<i64: 64, 32>}, {pipeline_mode = #tpu.pipeline_mode<synchronous>, transform_indices = @transform_1, window_bounds = array<i64: 32, 40>}, {transform_indices = @transform_2, window_bounds = array<i64: 1, 2, 40>}]} {
    %c0_i32 = arith.constant 0 : i32
    %0 = arith.cmpi eq, %arg1, %c0_i32 : i32
    %1 = arith.extui %0 : i1 to i32
    %c0_i32_0 = arith.constant 0 : i32
    %2 = arith.cmpi ne, %1, %c0_i32_0 : i32
    scf.if %2 {
      %cst_11 = arith.constant 0.000000e+00 : f32
      %26 = vector.broadcast %cst_11 : f32 to vector<2x32xf32>
      %c0_12 = arith.constant 0 : index
      %c0_13 = arith.constant 0 : index
      %27 = vector.load %arg6[%c0_12, %c0_13] : memref<2x32xf32, #tpu.memory_space<vmem>>, vector<2x32xf32>
      tpu.vector_store %arg6[%c0_12, %c0_13], %26 {strides = array<i32>} : memref<2x32xf32, #tpu.memory_space<vmem>>, vector<2x32xf32>,
      %28 = tpu.iota {dimensions = array<i32: 0>} : vector<2x1xi32>
      %c0_i32_14 = arith.constant 0 : i32
      %29 = vector.broadcast %c0_i32_14 : i32 to vector<2x1xi32>
      %c0_i32_15 = arith.constant 0 : i32
      %30 = vector.broadcast %c0_i32_15 : i32 to vector<2x1xi32>
      %c0_i32_16 = arith.constant 0 : i32
      %31 = vector.broadcast %c0_i32_16 : i32 to vector<2x1xi32>
      %32 = arith.cmpi eq, %28, %31 : vector<2x1xi32>
      %c0_17 = arith.constant 0 : index
      %33 = memref.load %arg2[%c0_17] : memref<3xi32, #tpu.memory_space<smem>>
      %34 = vector.broadcast %33 : i32 to vector<2x1xi32>
      %35 = arith.select %32, %34, %29 : vector<2x1xi1>, vector<2x1xi32>
      %c0_i32_18 = arith.constant 0 : i32
      %36 = vector.broadcast %c0_i32_18 : i32 to vector<2x1xi32>
      %37 = arith.cmpi eq, %28, %36 : vector<2x1xi32>
      %c1 = arith.constant 1 : index
      %38 = memref.load %arg2[%c1] : memref<3xi32, #tpu.memory_space<smem>>
      %39 = vector.broadcast %38 : i32 to vector<2x1xi32>
      %40 = arith.select %37, %39, %30 : vector<2x1xi1>, vector<2x1xi32>
      %c1_i32 = arith.constant 1 : i32
      %41 = vector.broadcast %c1_i32 : i32 to vector<2x1xi32>
      %42 = arith.cmpi eq, %28, %41 : vector<2x1xi32>
      %c1_19 = arith.constant 1 : index
      %43 = memref.load %arg2[%c1_19] : memref<3xi32, #tpu.memory_space<smem>>
      %44 = vector.broadcast %43 : i32 to vector<2x1xi32>
      %45 = arith.select %42, %44, %35 : vector<2x1xi1>, vector<2x1xi32>
      %c1_i32_20 = arith.constant 1 : i32
      %46 = vector.broadcast %c1_i32_20 : i32 to vector<2x1xi32>
      %47 = arith.cmpi eq, %28, %46 : vector<2x1xi32>
      %c2 = arith.constant 2 : index
      %48 = memref.load %arg2[%c2] : memref<3xi32, #tpu.memory_space<smem>>
      %49 = vector.broadcast %48 : i32 to vector<2x1xi32>
      %50 = arith.select %47, %49, %40 : vector<2x1xi1>, vector<2x1xi32>
      %c0_21 = arith.constant 0 : index
      %c0_22 = arith.constant 0 : index
      %51 = vector.load %arg7[%c0_21, %c0_22] : memref<2x1xi32, #tpu.memory_space<vmem>>, vector<2x1xi32>
      tpu.vector_store %arg7[%c0_21, %c0_22], %45 {strides = array<i32>} : memref<2x1xi32, #tpu.memory_space<vmem>>, vector<2x1xi32>,
      %c0_23 = arith.constant 0 : index
      %c0_24 = arith.constant 0 : index
      %52 = vector.load %arg8[%c0_23, %c0_24] : memref<2x1xi32, #tpu.memory_space<vmem>>, vector<2x1xi32>
      tpu.vector_store %arg8[%c0_23, %c0_24], %50 {strides = array<i32>} : memref<2x1xi32, #tpu.memory_space<vmem>>, vector<2x1xi32>,
    } else {
    }
    %c3_i32 = arith.constant 3 : i32
    %3 = arith.muli %arg0, %c3_i32 : i32
    %4 = arith.addi %3, %arg1 : i32
    %c64_i32 = arith.constant 64 : i32
    %5 = arith.muli %4, %c64_i32 : i32
    %6 = tpu.iota {dimensions = array<i32: 1>} : vector<2x64xi32>
    %7 = vector.broadcast %5 : i32 to vector<2x64xi32>
    %8 = arith.addi %7, %6 : vector<2x64xi32>
    %c0 = arith.constant 0 : index
    %c0_1 = arith.constant 0 : index
    %9 = vector.load %arg7[%c0, %c0_1] : memref<2x1xi32, #tpu.memory_space<vmem>>, vector<2x1xi32>
    %10 = vector.broadcast %9 : vector<2x1xi32> to vector<2x64xi32>
    %11 = arith.cmpi sge, %8, %10 : vector<2x64xi32>
    %c0_2 = arith.constant 0 : index
    %c0_3 = arith.constant 0 : index
    %12 = vector.load %arg8[%c0_2, %c0_3] : memref<2x1xi32, #tpu.memory_space<vmem>>, vector<2x1xi32>
    %13 = vector.broadcast %12 : vector<2x1xi32> to vector<2x64xi32>
    %14 = arith.cmpi slt, %8, %13 : vector<2x64xi32>
    %15 = arith.andi %11, %14 : vector<2x64xi1>
    %16 = arith.extui %15 : vector<2x64xi1> to vector<2x64xi32>
    %17 = arith.sitofp %16 : vector<2x64xi32> to vector<2x64xf32>
    %c0_4 = arith.constant 0 : index
    %c0_5 = arith.constant 0 : index
    %18 = vector.load %arg6[%c0_4, %c0_5] : memref<2x32xf32, #tpu.memory_space<vmem>>, vector<2x32xf32>
    %c0_6 = arith.constant 0 : index
    %c0_7 = arith.constant 0 : index
    %19 = vector.load %arg3[%c0_6, %c0_7] : memref<64x32xf32, #tpu.memory_space<vmem>>, vector<64x32xf32>
    %cst = arith.constant dense<0.000000e+00> : vector<2x32xf32>
    %20 = tpu.matmul %17, %19, %cst {dimension_numbers = #tpu.dot_dimension_numbers<[1], [0], [0], [1], [0, 0, 1, 1], [], []>} : vector<2x64xf32>, vector<64x32xf32>, vector<2x32xf32> -> vector<2x32xf32>
    %21 = arith.addf %18, %20 : vector<2x32xf32>
    %c0_8 = arith.constant 0 : index
    %c0_9 = arith.constant 0 : index
    %22 = vector.load %arg6[%c0_8, %c0_9] : memref<2x32xf32, #tpu.memory_space<vmem>>, vector<2x32xf32>
    tpu.vector_store %arg6[%c0_8, %c0_9], %21 {strides = array<i32>} : memref<2x32xf32, #tpu.memory_space<vmem>>, vector<2x32xf32>,
    %c2_i32 = arith.constant 2 : i32
    %23 = arith.cmpi eq, %arg1, %c2_i32 : i32
    %24 = arith.extui %23 : i1 to i32
    %c0_i32_10 = arith.constant 0 : i32
    %25 = arith.cmpi ne, %24, %c0_i32_10 : i32
    scf.if %25 {
      %c0_11 = arith.constant 0 : index
      %c0_12 = arith.constant 0 : index
      %26 = vector.load %arg6[%c0_11, %c0_12] : memref<2x32xf32, #tpu.memory_space<vmem>>, vector<2x32xf32>
      %c0_13 = arith.constant 0 : index
      %c0_14 = arith.constant 0 : index
      %27 = vector.load %arg4[%c0_13, %c0_14] : memref<32x40xf32, #tpu.memory_space<vmem>>, vector<32x40xf32>
      %cst_15 = arith.constant dense<0.000000e+00> : vector<2x40xf32>
      %28 = tpu.matmul %26, %27, %cst_15 {dimension_numbers = #tpu.dot_dimension_numbers<[1], [0], [0], [1], [0, 0, 1, 1], [], []>} : vector<2x32xf32>, vector<32x40xf32>, vector<2x40xf32> -> vector<2x40xf32>
      %c0_16 = arith.constant 0 : index
      %c0_17 = arith.constant 0 : index
      %c0_18 = arith.constant 0 : index
      %29 = vector.load %arg5[%c0_16, %c0_17, %c0_18] : memref<1x2x40xf32, #tpu.memory_space<vmem>>, vector<1x2x40xf32>
      %30 = vector.shape_cast %29 : vector<1x2x40xf32> to vector<2x40xf32>
      %31 = vector.shape_cast %28 : vector<2x40xf32> to vector<1x2x40xf32>
      tpu.vector_store %arg5[%c0_16, %c0_17, %c0_18], %31 {strides = array<i32>} : memref<1x2x40xf32, #tpu.memory_space<vmem>>, vector<1x2x40xf32>,
    } else {
    }
    return
  }
  func.func @transform_0(%arg0: i32, %arg1: i32, %arg2: memref<3xi32, #tpu.memory_space<smem>>) -> (i32, i32) {
    %c3_i32 = arith.constant 3 : i32
    %0 = arith.muli %arg0, %c3_i32 : i32
    %1 = arith.addi %0, %arg1 : i32
    %c0_i32 = arith.constant 0 : i32
    %c0_i32_0 = arith.constant 0 : i32
    return %1, %c0_i32 : i32, i32
  }
  func.func @transform_1(%arg0: i32, %arg1: i32, %arg2: memref<3xi32, #tpu.memory_space<smem>>) -> (i32, i32) {
    %c0_i32 = arith.constant 0 : i32
    %c0_i32_0 = arith.constant 0 : i32
    %c0_i32_1 = arith.constant 0 : i32
    return %c0_i32, %c0_i32_0 : i32, i32
  }
  func.func @transform_2(%arg0: i32, %arg1: i32, %arg2: memref<3xi32, #tpu.memory_space<smem>>) -> (i32, i32, i32) {
    %c0_i32 = arith.constant 0 : i32
    %c0_i32_0 = arith.constant 0 : i32
    %c0_i32_1 = arith.constant 0 : i32
    return %arg0, %c0_i32, %c0_i32_0 : i32, i32, i32
  }
}

</mosaic_0001>

<llo_original>
// kernel: tpu_custom_call.1
$region0: #{tpu_custom_call.1}
  #allocation0 [shape = 'u32[]', space=smem, size = 0x4, offset = 0x4, fixed_abs, tag = 'smem constant byte address 0x4 - core index']
  #allocation1 [shape = 'u32[144,128]{1,0:T(1,128)}', space=vmem, size = 0x12000, scoped, tag = 'internal scratch']
  #allocation2 [shape = 'f32[2,32]{1,0:T(2,128)}', space=vmem, size = 0x400, scoped, tag = 'scratch operand']
  #allocation3 [shape = 's32[2,1]{1,0:T(2,128)}', space=vmem, size = 0x400, scoped, tag = 'scratch operand']
  #allocation4 [shape = 's32[2,1]{1,0:T(2,128)}', space=vmem, size = 0x400, scoped, tag = 'scratch operand']
  #allocation5 [shape = 's32[1]{0}', space=sflag, size = 0x4, scoped, tag = 'scoped memory for tpu_custom_call.1']
  #allocation6 [shape = 'u8[512]{0}', space=smem, size = 0x200, scoped, tag = 'prefetched SMEM operand 0']
  %s0 = inlined_call_operand.vmem [shape: s32[3], index: 0, kind: input, shape index: {}]
  %s1 = inlined_call_operand.vmem [shape: f32[384,32], index: 1, kind: input, shape index: {}]
  %s2 = inlined_call_operand.vmem [shape: f32[32,40], index: 2, kind: input, shape index: {}]
  %s3 = inlined_call_operand.hbm [shape: f32[2,2,40], index: 3, kind: output, shape index: {}]
  %s4 = sld [smem:[#allocation0]]
  $region49: #{tpu_custom_call.1} parent=0
    _
  %s6 = ssub.s32 1, %s4
  %s7 = scalar_select 0, %s6, %s4
  %s8 = sshll.u32 %s0, 4
  %s9 = int_to_ptr.vmem [resolvable:$true] %s8
  %11 = dma.vmem_to_smem %s9, 16, [#allocation6], [#allocation5]
  %12 = dma.done [#allocation5], 16
  %13 = sfence
  $region1: #{tpu_custom_call.1} parent=0
    #allocation7 [shape = 'u8[2048]{0}', space=vmem, size = 0x800, scoped, tag = 'output window, operand 0']
    #allocation8 [shape = 's32[2]{0}', space=sflag, size = 0x8, scoped, tag = 'scoped memory for tpu_custom_call.1']
    %14 = vsyncpa [#allocation8], 0
    %s15 = scalar_lea.sflag [#allocation8], 1
    %16 = vsyncpa %s15, 0
    loop: start=0, step=1, limit=8
    $region2: #{tpu_custom_call.1} parent=1 // loop_pre_header
      _
    $region3: #{tpu_custom_call.1} parent=1 // loop_header
      %s18 = sphi 0, %s22
      %p19 = scmp.ge.s32.totalorder %s18, 8
      %s25 = sphi 0, %s37
      %s26 = sphi 0, %s33
      %s27 = sphi 0, %s25
      %s28 = sphi 0, %s26
      %s29 = sphi 0, %s27
      %s30 = sphi 0, %s28
      %s44 = sphi 0, %s46
      %s47 = sphi 0, %s44
      %s48 = sphi 0, %s47
      %s64 = sphi 0, %s48
      %s68 = sphi 0, %s68
      %s70 = sphi 0, %s68
      %s71 = sphi 0, %s70
      %s85 = sphi 0, %s71
      %s91 = sphi 0, %s93
      %s94 = sphi 0, %s91
      %s95 = sphi 0, %s94
      %s111 = sphi 0, %s95
    $region4: #{tpu_custom_call.1} parent=1 // loop_header_branch
      %21 = sbr.rel (%p19) target = $region8
    $region5: #{tpu_custom_call.1} parent=1 // loop_body
      %s23 = ssub.s32 %s18, 1
      %s24 = ssub.s32 %s18, 2
      %s31 = sadd.s32 1, %s26
      %p32 = scmp.ge.s32.totalorder %s31, 3
      %s33 = scalar_select %p32, 0, %s31
      %s34 = sadd.s32 1, %s25
      %s35 = scalar_select %p32, %s34, %s25
      %p36 = scmp.ge.s32.totalorder %s35, 2
      %s37 = scalar_select %p36, 0, %s35
      %s38 = smul.u32 %s25, 3
      %s39 = sadd.s32 %s38, %s26
      %s40 = smul.u32 %s37, 3
      %s41 = sadd.s32 %s40, %s33
      %s42 = ssub.s32 %s39, %s41
      %p43 = scmp.eq.s32.totalorder %s42, 0
      %s45 = sadd.s32 %s44, 1
      %s46 = scalar_select %p43, %s44, %s45
      %p49 = pneg %p43
      %p50 = scmp.eq.s32.totalorder %s18, 5
      %p51 = por %p49, %p50
      %p52 = scmp.ne.s32.totalorder %s44, %s47
      %p53 = scmp.eq.s32.totalorder %s18, 0
      %p54 = por %p52, %p53
      %p55 = scmp.ne.s32.totalorder %s44, %s47
      %p56 = scmp.eq.s32.totalorder %s23, 5
      %p57 = por %p55, %p56
      %p58 = scmp.ne.s32.totalorder %s47, %s48
      %p59 = scmp.eq.s32.totalorder %s23, 0
      %p60 = por %p58, %p59
      %p61 = scmp.ne.s32.totalorder %s47, %s48
      %p62 = scmp.eq.s32.totalorder %s24, 5
      %p63 = por %p61, %p62
      %p65 = scmp.ne.s32.totalorder %s48, %s64
      %p66 = scmp.eq.s32.totalorder %s24, 0
      %p67 = por %p65, %p66
      %s69 = sadd.s32 %s68, 1
      %p72 = scmp.eq.s32.totalorder %s18, 5
      %p73 = scmp.ne.s32.totalorder %s68, %s70
      %p74 = scmp.eq.s32.totalorder %s18, 0
      %p75 = por %p73, %p74
      %p76 = scmp.ne.s32.totalorder %s68, %s70
      %p77 = scmp.eq.s32.totalorder %s23, 5
      %p78 = por %p76, %p77
      %p79 = scmp.ne.s32.totalorder %s70, %s71
      %p80 = scmp.eq.s32.totalorder %s23, 0
      %p81 = por %p79, %p80
      %p82 = scmp.ne.s32.totalorder %s70, %s71
      %p83 = scmp.eq.s32.totalorder %s24, 5
      %p84 = por %p82, %p83
      %p86 = scmp.ne.s32.totalorder %s71, %s85
      %p87 = scmp.eq.s32.totalorder %s24, 0
      %p88 = por %p86, %p87
      %s89 = ssub.s32 %s25, %s37
      %p90 = scmp.eq.s32.totalorder %s89, 0
      %s92 = sadd.s32 %s91, 1
      %s93 = scalar_select %p90, %s91, %s92
      %p96 = pneg %p90
      %p97 = scmp.eq.s32.totalorder %s18, 5
      %p98 = por %p96, %p97
      %p99 = scmp.ne.s32.totalorder %s91, %s94
      %p100 = scmp.eq.s32.totalorder %s18, 0
      %p101 = por %p99, %p100
      %p102 = scmp.ne.s32.totalorder %s91, %s94
      %p103 = scmp.eq.s32.totalorder %s23, 5
      %p104 = por %p102, %p103
      %p105 = scmp.ne.s32.totalorder %s94, %s95
      %p106 = scmp.eq.s32.totalorder %s23, 0
      %p107 = por %p105, %p106
      %p108 = scmp.ne.s32.totalorder %s94, %s95
      %p109 = scmp.eq.s32.totalorder %s24, 5
      %p110 = por %p108, %p109
      %p112 = scmp.ne.s32.totalorder %s95, %s111
      %p113 = scmp.eq.s32.totalorder %s24, 0
      %p114 = por %p112, %p113
      %p115 = scmp.le.s32.totalorder 1, %s18
      %p116 = scmp.lt.s32.totalorder %s18, 7
      %p117 = pnand %p115, %p116
      %p118 = pneg %p117
      // Predicated region
      $region9: #{tpu_custom_call.1} parent=5 // pred_check
        _
      $region10: #{tpu_custom_call.1} parent=5 // pred_check_branch
        %120 = sbr.rel (%p117) target = $region12
      $region11: #{tpu_custom_call.1} parent=5 // pred_region
        %s121 = ssub.s32 %s18, 1
        // Predicated region
        $region13: #{tpu_custom_call.1} parent=11 // pred_check
          %p122 = pneg %p81
        $region14: #{tpu_custom_call.1} parent=11 // pred_check_branch
          %124 = sbr.rel (%p122) target = $region16
        $region15: #{tpu_custom_call.1} parent=11 // pred_region
          _
        $region16: #{tpu_custom_call.1} parent=11 // pred_fallthru
          _
      $region12: #{tpu_custom_call.1} parent=5 // pred_fallthru
        _
      %p125 = scmp.lt.s32.totalorder %s18, 6
      // Predicated region
      $region17: #{tpu_custom_call.1} parent=5 // pred_check
        %p126 = pneg %p125
      $region18: #{tpu_custom_call.1} parent=5 // pred_check_branch
        %128 = sbr.rel (%p126) target = $region20
      $region19: #{tpu_custom_call.1} parent=5 // pred_region
        // Predicated region
        $region21: #{tpu_custom_call.1} parent=19 // pred_check
          %p129 = pneg %p54
        $region22: #{tpu_custom_call.1} parent=19 // pred_check_branch
          %131 = sbr.rel (%p129) target = $region24
        $region23: #{tpu_custom_call.1} parent=19 // pred_region
          %s132 = smul.u32 %s25, 3
          %s133 = sadd.s32 %s132, %s26
          %s134 = smul.u32 8, %s133
          %p135 = scmp.lt.s32.totalorder %s134, 47
          %s136 = scalar_select %p135, %s134, 47
          %s137 = smul.addr %s136, 8
          %s138 = scalar_lea.vmem %s1, %s137
          %s139 = smul.u32 %s25, 3
          %s140 = sadd.s32 %s139, %s26
          %s141 = smul.u32 8, %s140
        $region24: #{tpu_custom_call.1} parent=19 // pred_fallthru
          _
      $region20: #{tpu_custom_call.1} parent=5 // pred_fallthru
        _
      %p142 = scmp.le.s32.totalorder 1, %s18
      %p143 = scmp.lt.s32.totalorder %s18, 7
      %p144 = pnand %p142, %p143
      %p145 = pneg %p144
      // Predicated region
      $region25: #{tpu_custom_call.1} parent=5 // pred_check
        _
      $region26: #{tpu_custom_call.1} parent=5 // pred_check_branch
        %147 = sbr.rel (%p144) target = $region28
      $region27: #{tpu_custom_call.1} parent=5 // pred_region
        %s148 = ssub.s32 %s18, 1
        %s149 = smul.u32 %s27, 3
        %s150 = sadd.s32 %s149, %s28
        %s151 = smul.u32 8, %s150
        %p152 = scmp.lt.s32.totalorder %s151, 47
        %s153 = scalar_select %p152, %s151, 47
        %s154 = smul.addr %s153, 8
        %s155 = scalar_lea.vmem %s1, %s154
        %p156 = pneg %p60
        %p157 = pneg %p57
        %p158 = pneg %p81
        %p159 = pneg %p78
        %p160 = pneg %p107
        %p161 = pneg %p104
        %s162 = sand.u32 %s94, 1
        %s163 = scalar_lea.sflag [#allocation8], %s162
        %s164 = sand.u32 %s94, 1
        %s165 = smul.addr %s164, 2
        %s166 = scalar_lea.vmem [#allocation7], %s165
        %s167 = smul.u32 %s27, 3
        %s168 = sadd.s32 %s167, %s28
        %s169 = smul.u32 8, %s168
        %p170 = scmp.lt.s32.totalorder %s169, 47
        %s171 = scalar_select %p170, %s169, 47
        %s172 = smul.addr %s171, 8
        %s173 = scalar_lea.vmem %s1, %s172
        %s174 = smul.u32 %s27, 3
        %s175 = sadd.s32 %s174, %s28
        %s176 = smul.u32 8, %s175
        %p177 = scmp.eq.s32.totalorder %s28, 0
        // Predicated region
        $region29: #{tpu_custom_call.1} parent=27 // pred_check
          %p178 = pneg %p177
        $region30: #{tpu_custom_call.1} parent=27 // pred_check_branch
          %180 = sbr.rel (%p178) target = $region32
        $region31: #{tpu_custom_call.1} parent=27 // pred_region
          %vm181 = vcmask 254976
          %182 = vst.msk [vmem:[#allocation2] sm:$0x3] %vm181, 0.0
          %v183 = vlaneseq
          %v184 = vshrl.u32 %v183, 7
          %vm185 = vcmp.eq.s32.totalorder %v184, 0
          %s186 = sld [smem:[#allocation6]]
          %v187 = vstv %s186
          %v188 = vsel %vm185, %v187, 0
          %s189 = sld [smem:[#allocation6 + $0x1]]
          %v190 = vstv %s189
          %v191 = vsel %vm185, %v190, 0
          %vm192 = vcmp.eq.s32.totalorder %v184, 1
          %v193 = vsel %vm192, %v190, %v188
          %s194 = sld [smem:[#allocation6 + $0x2]]
          %v195 = vstv %s194
          %v196 = vsel %vm192, %v195, %v191
          %vm197 = vcmask 1024
          %198 = vst.msk [vmem:[#allocation3] sm:$0x3] %vm197, %v193
          %199 = vst.msk [vmem:[#allocation4] sm:$0x3] %vm197, %v196
        $region32: #{tpu_custom_call.1} parent=27 // pred_fallthru
          _
        %s200 = smul.u32 %s27, 3
        %s201 = sadd.s32 %s200, %s28
        %s202 = smul.u32 %s201, 64
        %v203 = vlaneseq
        %v204 = vand.u32 %v203, 127
        %v205 = vstv %s202
        %v206 = vadd.s32 %v205, %v204
        %v207 = vld [vmem:[#allocation3] sm:$0x3]
        %208 = vset.pattern.permute.xlu0 0
        %209 = vperm.xlu0 %208, %v207
        %v210 = vpop.permute.xlu0 %209
        %vm211 = vcmp.ge.s32.totalorder %v206, %v210
        %v212 = vld [vmem:[#allocation4] sm:$0x3]
        %213 = vset.pattern.permute.xlu0 0
        %214 = vperm.xlu0 %213, %v212
        %v215 = vpop.permute.xlu0 %214
        %vm216 = vcmp.lt.s32.totalorder %v206, %v215
        %vm217 = vmand %vm211, %vm216
        %v218 = vsel %vm217, 1, 0
        %v219 = vcvt.s32.f32 %v218
        %v220 = vld [vmem:[#allocation2] sm:$0x3]
        %v221 = vld [vmem:[%s173] sm:$0xff]
        %v222 = vld [vmem:[%s173 + $0x8] sm:$0xff]
        %v223 = vld [vmem:[%s173 + $0x10] sm:$0xff]
        %v224 = vld [vmem:[%s173 + $0x18] sm:$0xff]
        %v225 = vld [vmem:[%s173 + $0x20] sm:$0xff]
        %v226 = vld [vmem:[%s173 + $0x28] sm:$0xff]
        %v227 = vld [vmem:[%s173 + $0x30] sm:$0xff]
        %v228 = vld [vmem:[%s173 + $0x38] sm:$0xff]
        %vm229 = vcmask 523264
        %v231 = vsel %vm229, %v219, 0
        %233 = vmatprep.subr.mxu0 0.0
        %234 = vmatpush1.msra.mxu0 %v221
        %235 = vmatprep.subr.mxu0 0.0
        %236 = vmatpush1.msra.mxu0 %v222
        %237 = vmatprep.subr.mxu0 0.0
        %238 = vmatpush1.msra.mxu0 %v223
        %239 = vmatprep.subr.mxu0 0.0
        %240 = vmatpush1.msra.mxu0 %v224
        %241 = vmatprep.subr.mxu0 0.0
        %242 = vmatpush1.msra.mxu0 %v225
        %243 = vmatprep.subr.mxu0 0.0
        %244 = vmatpush1.msra.mxu0 %v226
        %245 = vmatprep.subr.mxu0 0.0
        %246 = vmatpush1.msra.mxu0 %v227
        %247 = vmatprep.subr.mxu0 0.0
        %248 = vmatpush1.msra.mxu0 %v228
        %249 = vmatprep.subr.mxu0 0.0
        %250 = vmatpush1.msra.mxu0 0.0
        %251 = vmatprep.subr.mxu0 0.0
        %252 = vmatpush1.msra.mxu0 0.0
        %253 = vmatprep.subr.mxu0 0.0
        %254 = vmatpush1.msra.mxu0 0.0
        %255 = vmatprep.subr.mxu0 0.0
        %256 = vmatpush1.msra.mxu0 0.0
        %257 = vmatprep.subr.mxu0 0.0
        %258 = vmatpush1.msra.mxu0 0.0
        %259 = vmatprep.subr.mxu0 0.0
        %260 = vmatpush1.msra.mxu0 0.0
        %261 = vmatprep.subr.mxu0 0.0
        %262 = vmatpush1.msra.mxu0 0.0
        %263 = vmatprep.subr.mxu0 0.0
        %264 = vmatpush1.msra.mxu0 0.0
        %265 = vmatprep.subr.mxu0 0.0
        %266 = vmatpush1.msra.mxu0 0.0
        %267 = vmatprep.subr.mxu0 0.0
        %268 = vmatpush1.msra.mxu0 0.0
        %269 = vmatprep.subr.mxu0 0.0
        %270 = vmatpush1.msra.mxu0 0.0
        %271 = vmatprep.subr.mxu0 0.0
        %272 = vmatpush1.msra.mxu0 0.0
        %273 = vmatprep.subr.mxu0 0.0
        %274 = vmatpush1.msra.mxu0 0.0
        %275 = vmatprep.subr.mxu0 0.0
        %276 = vmatpush1.msra.mxu0 0.0
        %277 = vmatprep.subr.mxu0 0.0
        %278 = vmatpush1.msra.mxu0 0.0
        %279 = vmatprep.subr.mxu0 0.0
        %280 = vmatpush1.msra.mxu0 0.0
        %281 = vmatprep.subr.mxu0 0.0
        %282 = vmatpush1.msra.mxu0 0.0
        %283 = vmatprep.subr.mxu0 0.0
        %284 = vmatpush1.msra.mxu0 0.0
        %285 = vmatprep.subr.mxu0 0.0
        %286 = vmatpush1.msra.mxu0 0.0
        %287 = vmatprep.subr.mxu0 0.0
        %288 = vmatpush1.msra.mxu0 0.0
        %289 = vmatprep.subr.mxu0 0.0
        %290 = vmatpush1.msra.mxu0 0.0
        %291 = vmatprep.subr.mxu0 0.0
        %292 = vmatpush1.msra.mxu0 0.0
        %293 = vmatprep.subr.mxu0 0.0
        %294 = vmatpush1.msra.mxu0 0.0
        %295 = vmatprep.subr.mxu0 0.0
        %296 = vmatpush1.msra.mxu0 0.0
        %297 = vmatprep.mubr.f32.mxu0 0.0
        %298 = vmatmul.mubr.f32.gmra.mrb[0].mxu0 %v231
        %v299 = vpop.f32.mrb[0].mxu0
        %v300 = vadd.f32 0.0, %v299
        %v301 = vpop.f32.mrb[0].mxu0
        %302 = vdwg.mxu0
        %v303 = vadd.f32 %v220, %v300
        %vm304 = vcmask 254976
        %305 = vst.msk [vmem:[#allocation2] sm:$0x3] %vm304, %v303
        %p306 = scmp.eq.s32.totalorder %s28, 2
        // Predicated region
        $region33: #{tpu_custom_call.1} parent=27 // pred_check
          %p307 = pneg %p306
        $region34: #{tpu_custom_call.1} parent=27 // pred_check_branch
          %309 = sbr.rel (%p307) target = $region36
        $region35: #{tpu_custom_call.1} parent=27 // pred_region
          %v310 = vld [vmem:[#allocation2] sm:$0x3]
          %v311 = vld [vmem:[%s2] sm:$0xff]
          %v312 = vld [vmem:[%s2 + $0x8] sm:$0xff]
          %v313 = vld [vmem:[%s2 + $0x10] sm:$0xff]
          %v314 = vld [vmem:[%s2 + $0x18] sm:$0xff]
          %vm315 = vcmask 261120
          %v317 = vsel %vm315, %v310, 0
          %319 = vmatprep.subr.mxu0 0.0
          %320 = vmatpush1.msra.mxu0 %v311
          %321 = vmatprep.subr.mxu0 0.0
          %322 = vmatpush1.msra.mxu0 %v312
          %323 = vmatprep.subr.mxu0 0.0
          %324 = vmatpush1.msra.mxu0 %v313
          %325 = vmatprep.subr.mxu0 0.0
          %326 = vmatpush1.msra.mxu0 %v314
          %327 = vmatprep.subr.mxu0 0.0
          %328 = vmatpush1.msra.mxu0 0.0
          %329 = vmatprep.subr.mxu0 0.0
          %330 = vmatpush1.msra.mxu0 0.0
          %331 = vmatprep.subr.mxu0 0.0
          %332 = vmatpush1.msra.mxu0 0.0
          %333 = vmatprep.subr.mxu0 0.0
          %334 = vmatpush1.msra.mxu0 0.0
          %335 = vmatprep.subr.mxu0 0.0
          %336 = vmatpush1.msra.mxu0 0.0
          %337 = vmatprep.subr.mxu0 0.0
          %338 = vmatpush1.msra.mxu0 0.0
          %339 = vmatprep.subr.mxu0 0.0
          %340 = vmatpush1.msra.mxu0 0.0
          %341 = vmatprep.subr.mxu0 0.0
          %342 = vmatpush1.msra.mxu0 0.0
          %343 = vmatprep.subr.mxu0 0.0
          %344 = vmatpush1.msra.mxu0 0.0
          %345 = vmatprep.subr.mxu0 0.0
          %346 = vmatpush1.msra.mxu0 0.0
          %347 = vmatprep.subr.mxu0 0.0
          %348 = vmatpush1.msra.mxu0 0.0
          %349 = vmatprep.subr.mxu0 0.0
          %350 = vmatpush1.msra.mxu0 0.0
          %351 = vmatprep.subr.mxu0 0.0
          %352 = vmatpush1.msra.mxu0 0.0
          %353 = vmatprep.subr.mxu0 0.0
          %354 = vmatpush1.msra.mxu0 0.0
          %355 = vmatprep.subr.mxu0 0.0
          %356 = vmatpush1.msra.mxu0 0.0
          %357 = vmatprep.subr.mxu0 0.0
          %358 = vmatpush1.msra.mxu0 0.0
          %359 = vmatprep.subr.mxu0 0.0
          %360 = vmatpush1.msra.mxu0 0.0
          %361 = vmatprep.subr.mxu0 0.0
          %362 = vmatpush1.msra.mxu0 0.0
          %363 = vmatprep.subr.mxu0 0.0
          %364 = vmatpush1.msra.mxu0 0.0
          %365 = vmatprep.subr.mxu0 0.0
          %366 = vmatpush1.msra.mxu0 0.0
          %367 = vmatprep.subr.mxu0 0.0
          %368 = vmatpush1.msra.mxu0 0.0
          %369 = vmatprep.subr.mxu0 0.0
          %370 = vmatpush1.msra.mxu0 0.0
          %371 = vmatprep.subr.mxu0 0.0
          %372 = vmatpush1.msra.mxu0 0.0
          %373 = vmatprep.subr.mxu0 0.0
          %374 = vmatpush1.msra.mxu0 0.0
          %375 = vmatprep.subr.mxu0 0.0
          %376 = vmatpush1.msra.mxu0 0.0
          %377 = vmatprep.subr.mxu0 0.0
          %378 = vmatpush1.msra.mxu0 0.0
          %379 = vmatprep.subr.mxu0 0.0
          %380 = vmatpush1.msra.mxu0 0.0
          %381 = vmatprep.subr.mxu0 0.0
          %382 = vmatpush1.msra.mxu0 0.0
          %383 = vmatprep.mubr.f32.mxu0 0.0
          %384 = vmatmul.mubr.f32.gmra.mrb[0].mxu0 %v317
          %v385 = vpop.f32.mrb[0].mxu0
          %v386 = vadd.f32 0.0, %v385
          %v387 = vpop.f32.mrb[0].mxu0
          %388 = vdwg.mxu0
          %vm389 = vcmask 320512
          %390 = vst.msk [vmem:[%s166] sm:$0x3] %vm389, %v386
        $region36: #{tpu_custom_call.1} parent=27 // pred_fallthru
          _
        %s391 = sand.u32 %s94, 1
        %s392 = scalar_lea.sflag [#allocation8], %s391
        %s393 = sand.u32 %s94, 1
        %s394 = smul.addr %s393, 2
        %s395 = scalar_lea.vmem [#allocation7], %s394
        // Predicated region
        $region37: #{tpu_custom_call.1} parent=27 // pred_check
          %p396 = pneg %p104
        $region38: #{tpu_custom_call.1} parent=27 // pred_check_branch
          %398 = sbr.rel (%p396) target = $region40
        $region39: #{tpu_custom_call.1} parent=27 // pred_region
          %s400 = ssub.s32 32, 32
          %401 = vsyncadd %s392, %s400
          %s402 = smul.addr %s27, 32
          %s403 = scalar_lea.hbm %s3, %s402
          %s405 = sshll.u32 %s395, 4
          %s406 = int_to_ptr.vmem [resolvable:$true] %s405
          %408 = dma.vmem_to_hbm [thread:$0]  %s406, 32, %s403, %s392
        $region40: #{tpu_custom_call.1} parent=27 // pred_fallthru
          _
      $region28: #{tpu_custom_call.1} parent=5 // pred_fallthru
        _
      %p409 = scmp.le.s32.totalorder 2, %s18
      // Predicated region
      $region41: #{tpu_custom_call.1} parent=5 // pred_check
        %p410 = pneg %p409
      $region42: #{tpu_custom_call.1} parent=5 // pred_check_branch
        %412 = sbr.rel (%p410) target = $region44
      $region43: #{tpu_custom_call.1} parent=5 // pred_region
        %s413 = ssub.s32 %s18, 2
        // Predicated region
        $region45: #{tpu_custom_call.1} parent=43 // pred_check
          %p414 = pneg %p110
        $region46: #{tpu_custom_call.1} parent=43 // pred_check_branch
          %416 = sbr.rel (%p414) target = $region48
        $region47: #{tpu_custom_call.1} parent=43 // pred_region
          %s417 = sand.u32 %s95, 1
          %s418 = scalar_lea.sflag [#allocation8], %s417
          %s419 = sand.u32 %s95, 1
          %s420 = smul.addr %s419, 2
          %s421 = scalar_lea.vmem [#allocation7], %s420
          %422 = dma.done %s418, 32
        $region48: #{tpu_custom_call.1} parent=43 // pred_fallthru
          _
      $region44: #{tpu_custom_call.1} parent=5 // pred_fallthru
        _
    $region6: #{tpu_custom_call.1} parent=1 // loop_footer
      %s22 = sadd.s32 1, %s18
    $region7: #{tpu_custom_call.1} parent=1 // loop_footer_branch
      %17 = sbr.rel target = $region3
    $region8: #{tpu_custom_call.1} parent=1 // loop_exit
      _
    %423 = vsyncpa [#allocation8], 1
    %s424 = scalar_lea.sflag [#allocation8], 1
    %425 = vsyncpa %s424, 1

</llo_original>
